<compile_context>
chip_gen: v7x
topology: tpu7x:2x2x1
jax: 0.10.0
libtpu: 0.0.40
codegen_flags: <defaults>
</compile_context>

<pallas_src>
import functools
import math

import jax
import jax.numpy as jnp
from jax.experimental import pallas as pl
from jax.experimental.pallas import tpu as pltpu

_LANE = 128


def _round_up(x, m):
    return ((x + m - 1) // m) * m


def _vmem_params():
    """(scoped-VMEM ask, per-input-tile byte budget), generation-aware."""
    try:
        cap = int(pltpu.get_tpu_info().vmem_capacity_bytes)
    except Exception:
        cap = 64 * 1024 * 1024                      # conservative (v7x per-core)
    limit = min((cap * 3) // 4, 64 * 1024 * 1024)   # <=48 MiB on v7x, 64 MiB on v5e/v6e
    # 2 inputs x 2 pipeline buffers live at once; keep ~2/3 of the limit for them.
    return limit, limit // 6


def _spatial_splits():
    """2-way spatial split to feed v7x's two TensorCores; 1 on v5e/v6e."""
    try:
        kind = jax.devices()[0].device_kind.lower()
    except Exception:
        return 1
    return 2 if ("v7" in kind or "7x" in kind) else 1


def _sublane_pack(dtype):
    # Required second-minor granularity: f32 -> 8, bf16/f16 -> 16, int8/bool -> 32.
    return max(8, 32 // max(1, jnp.dtype(dtype).itemsize))


def _dice_sums_kernel(pred_ref, gt_ref, out_ref, acc_ref, *, logit_th, r_total):
    """Accumulate per-channel (intersection, sum(pred_bin), sum(gt)).

    pred_ref, gt_ref : (1, C, TR, 128) VMEM tiles of the current block.
    out_ref          : (1, 1, 3, C) f32 block, resident across the r grid axis.
    acc_ref          : (3, C, 128) f32 lane-wise partial sums (VMEM scratch).
    """
    p = pl.program_id(1)
    r = pl.program_id(2)
    n_r = pl.num_programs(2)

    @pl.when(r == 0)
    def _init():
        acc_ref[...] = jnp.zeros_like(acc_ref)

    c, tr = pred_ref.shape[1], pred_ref.shape[2]
    pred = pred_ref[0].astype(jnp.float32)        # (C, TR, 128)
    g = gt_ref[0].astype(jnp.float32)

    # Mask rows past the end of the data (partial tail tile / fully-masked
    # duplicate block when the index_map clamp was active).
    row_start = (p * n_r + r) * tr
    rows = jax.lax.broadcasted_iota(jnp.int32, (c, tr, 128), 1) + row_start
    valid = rows < r_total

    # sigmoid is monotone: sigmoid(x) >= th  <=>  x >= logit(th)  (no EUP work).
    thr = pred >= logit_th
    gval = jnp.where(valid, g, 0.0)
    inter = jnp.where(thr, gval, 0.0)
    pcnt = jnp.where(jnp.logical_and(thr, valid), 1.0, 0.0)

    acc_ref[0] += jnp.sum(inter, axis=1)          # intersection     (C, 128)
    acc_ref[1] += jnp.sum(pcnt, axis=1)           # sum(pred_bin)
    acc_ref[2] += jnp.sum(gval, axis=1)           # sum(gt)

    @pl.when(r == n_r - 1)
    def _finalize():
        out_ref[...] = jnp.sum(acc_ref[...], axis=-1)[None, None]   # (1,1,3,C)


def _dice_sums(predict, gt, th, nsplit=None):
    """Per-(batch, channel) [intersection, sum(pred_bin), sum(gt)] via Pallas."""
    B, C = predict.shape[0], predict.shape[1]
    S = math.prod(predict.shape[2:])

    if not jnp.issubdtype(predict.dtype, jnp.floating):
        predict = predict.astype(jnp.float32)
    if gt.dtype == jnp.bool_:
        gt = gt.astype(jnp.float32)

    pred3 = predict.reshape(B, C, S)
    gt3 = gt.reshape(B, C, S)

    # Pad only to the next multiple of 128 lanes (cheap; only when misaligned).
    # pred pad value thresholds to 0, gt pad contributes 0 to every sum.
    # Note: assumes a static Python th with 0 < th (degenerate th<=0 + padding
    # would mis-count the <=127 pad voxels).
    s_pad = _round_up(S, _LANE)
    if s_pad != S:
        neg = jnp.finfo(pred3.dtype).min
        pred3 = jnp.pad(pred3, ((0, 0), (0, 0), (0, s_pad - S)), constant_values=neg)
        gt3 = jnp.pad(gt3, ((0, 0), (0, 0), (0, s_pad - S)))
    r_total = s_pad // _LANE
    pred4 = pred3.reshape(B, C, r_total, _LANE)
    gt4 = gt3.reshape(B, C, r_total, _LANE)

    th = float(th)
    if th <= 0.0:
        logit_th = float("-inf")
    elif th >= 1.0:
        logit_th = float("inf")
    else:
        logit_th = math.log(th / (1.0 - th))

    nsplit = _spatial_splits() if nsplit is None else max(1, int(nsplit))

    itemsize = max(pred4.dtype.itemsize, gt4.dtype.itemsize)
    pack = max(_sublane_pack(pred4.dtype), _sublane_pack(gt4.dtype))
    vmem_limit, tile_budget = _vmem_params()

    per_row_bytes = C * _LANE * itemsize
    tr_cap = max(pack, (tile_budget // per_row_bytes) // pack * pack)
    target_rows = pl.cdiv(r_total, nsplit)
    if r_total < pack:
        tr = r_total                                   # block == full dim
    else:
        tr = min(tr_cap, _round_up(target_rows, pack), (r_total // pack) * pack)
    n_r = pl.cdiv(target_rows, tr)
    max_blk = pl.cdiv(r_total, tr) - 1                 # clamp target (in-bounds DMA)

    def in_index_map(b, p, r):
        return (b, 0, jnp.minimum(p * n_r + r, max_blk), 0)

    in_spec = pl.BlockSpec((1, C, tr, _LANE), in_index_map)
    out_spec = pl.BlockSpec((1, 1, 3, C), lambda b, p, r: (b, p, 0, 0))

    kernel = functools.partial(_dice_sums_kernel, logit_th=logit_th, r_total=r_total)

    bytes_accessed = (pred4.size * pred4.dtype.itemsize
                      + gt4.size * gt4.dtype.itemsize
                      + B * nsplit * 3 * C * 4)
    cost = pl.CostEstimate(flops=int(7 * B * C * s_pad), transcendentals=0,
                           bytes_accessed=int(bytes_accessed))

    sums = pl.pallas_call(
        kernel,
        out_shape=jax.ShapeDtypeStruct((B, nsplit, 3, C), jnp.float32),
        grid_spec=pltpu.PrefetchScalarGridSpec(
            num_scalar_prefetch=0,
            grid=(B, nsplit, n_r),
            in_specs=[in_spec, in_spec],
            out_specs=out_spec,
            scratch_shapes=[pltpu.VMEM((3, C, _LANE), jnp.float32)],
        ),
        compiler_params=pltpu.CompilerParams(
            dimension_semantics=("parallel", "parallel", "arbitrary"),
            vmem_limit_bytes=int(vmem_limit),
        ),
        cost_estimate=cost,
    )(pred4, gt4)

    sums = jnp.sum(sums, axis=1)                       # (B, 3, C)
    return sums[:, 0, :], sums[:, 1, :], sums[:, 2, :]


def labeled_dice_metric(predict, gt, pred_labels, gt_labels, th=0.5, is_average=True,
                        nsplit=None):
    """JAX/Pallas equivalent of LabeledDiceMetric.forward (dims=[2,3,4])."""
    inter, psum, gsum = _dice_sums(predict, gt, th, nsplit=nsplit)    # each [B, C]

    dice = (2.0 * inter + 1e-05) / (psum + gsum + 1e-05)              # [B, C]

    # Per-batch label corrections (broadcast over channels, matching `dice[i] = scalar`).
    pl_lbl = pred_labels.astype(jnp.int32)                            # [B]
    gt_lbl = gt_labels.astype(jnp.int32)                              # [B]
    total_pred = jnp.sum(psum, axis=1)                                # [B] == sum(pred[i])

    keep = (pl_lbl == 1) & (gt_lbl == 1)
    val_10 = jnp.where(total_pred > 125.0, 0.0, 0.95)                 # pred=1, gt=0 case
    override = jnp.where(
        (pl_lbl == 0) & (gt_lbl == 0), 0.95,
        jnp.where((pl_lbl == 0) & (gt_lbl == 1), 0.0, val_10),
    )                                                                  # [B]

    dice = jnp.where(keep[:, None], dice, override[:, None])          # [B, C]
    return dice.mean(axis=0) if is_average else dice.sum(axis=0)


def _reference(predict, gt, pred_labels, gt_labels, th=0.5, is_average=True):
    """Pure-JAX reference (mirrors the PyTorch code)."""
    pred = jax.nn.sigmoid(predict.astype(jnp.float32))
    pred = jnp.where(pred >= th, 1.0, 0.0)
    g = gt.astype(jnp.float32)
    dims = (2, 3, 4)
    inter = jnp.sum(pred * g, axis=dims)
    union = jnp.sum(pred, axis=dims) + jnp.sum(g, axis=dims)
    dice = (2.0 * inter + 1e-05) / (union + 1e-05)
    total_pred = jnp.sum(pred, axis=(1, 2, 3, 4))
    pl_lbl = pred_labels.astype(jnp.int32)
    gt_lbl = gt_labels.astype(jnp.int32)
    keep = (pl_lbl == 1) & (gt_lbl == 1)
    val_10 = jnp.where(total_pred > 125.0, 0.0, 0.95)
    override = jnp.where(
        (pl_lbl == 0) & (gt_lbl == 0), 0.95,
        jnp.where((pl_lbl == 0) & (gt_lbl == 1), 0.0, val_10),
    )
    dice = jnp.where(keep[:, None], dice, override[:, None])
    return dice.mean(axis=0) if is_average else dice.sum(axis=0)


if __name__ == "__main__":
    key = jax.random.PRNGKey(0)
    k1, k2, k3, k4 = jax.random.split(key, 4)

    # Case 1: 128-aligned spatial extent, auto split selection.
    B, C, D, H, W = 3, 4, 4, 8, 16            # S = D*H*W = 512
    predict = jax.random.normal(k1, (B, C, D, H, W), dtype=jnp.float32)
    gt = (jax.random.uniform(k2, (B, C, D, H, W)) > 0.5).astype(jnp.float32)
    pred_labels = jnp.array([1, 0, 1], dtype=jnp.int32)   # exercises keep / (0,1) / (1,0)
    gt_labels = jnp.array([1, 1, 0], dtype=jnp.int32)

    out = labeled_dice_metric(predict, gt, pred_labels, gt_labels)
    out = jax.block_until_ready(out)
    ref = _reference(predict, gt, pred_labels, gt_labels)
    assert out.shape == (C,)
    assert jnp.allclose(out, ref, atol=1e-5, rtol=1e-5), (out, ref)

    # Case 2: non-128-aligned S (small pad path), forced 2-way spatial split
    # (validates the v7x split + clamped/masked tail blocks), is_average=False.
    B2, D2, H2, W2 = 2, 5, 30, 30             # S = 4500 -> padded to 4608
    p2 = jax.random.normal(k3, (B2, C, D2, H2, W2), dtype=jnp.float32)
    g2 = (jax.random.uniform(k4, (B2, C, D2, H2, W2)) > 0.5).astype(jnp.float32)
    pl2 = jnp.array([1, 1], dtype=jnp.int32)
    gl2 = jnp.array([1, 0], dtype=jnp.int32)

    out2 = labeled_dice_metric(p2, g2, pl2, gl2, is_average=False, nsplit=2)
    out2 = jax.block_until_ready(out2)
    ref2 = _reference(p2, g2, pl2, gl2, is_average=False)
    assert out2.shape == (C,)
    assert jnp.allclose(out2, ref2, atol=1e-5, rtol=1e-5), (out2, ref2)

    print("KERNEL_OK")
</pallas_src>

<mosaic_0001>
module attributes {stable_mosaic.version = 11 : i64} {
  func.func @_dice_sums_kernel(%arg0: i32, %arg1: i32, %arg2: i32, %arg3: memref<1x4x4x128xf32, #tpu.memory_space<vmem>>, %arg4: memref<1x4x4x128xf32, #tpu.memory_space<vmem>>, %arg5: memref<1x1x3x4xf32, #tpu.memory_space<vmem>>, %arg6: memref<3x4x128xf32, #tpu.memory_space<vmem>>) attributes {dimension_semantics = [#tpu.dimension_semantics<parallel>, #tpu.dimension_semantics<parallel>, #tpu.dimension_semantics<arbitrary>], iteration_bounds = array<i64: 3, 1, 1>, scalar_prefetch = 0 : i64, scratch_operands = 1 : i64, tpu.core_type = #tpu.core_type<tc>, window_params = [{transform_indices = @transform_0, window_bounds = array<i64: 1, 4, 4, 128>}, {transform_indices = @transform_1, window_bounds = array<i64: 1, 4, 4, 128>}, {transform_indices = @transform_2, window_bounds = array<i64: 1, 1, 3, 4>}]} {
    %c0_i32 = arith.constant 0 : i32
    %0 = arith.cmpi eq, %arg2, %c0_i32 : i32
    %1 = arith.extui %0 : i1 to i32
    %c0_i32_0 = arith.constant 0 : i32
    %2 = arith.cmpi ne, %1, %c0_i32_0 : i32
    scf.if %2 {
      %cst_34 = arith.constant 0.000000e+00 : f32
      %49 = vector.broadcast %cst_34 : f32 to vector<3x4x128xf32>
      %c0_35 = arith.constant 0 : index
      %c0_36 = arith.constant 0 : index
      %c0_37 = arith.constant 0 : index
      %50 = vector.load %arg6[%c0_35, %c0_36, %c0_37] : memref<3x4x128xf32, #tpu.memory_space<vmem>>, vector<3x4x128xf32>
      tpu.vector_store %arg6[%c0_35, %c0_36, %c0_37], %49 {strides = array<i32>} : memref<3x4x128xf32, #tpu.memory_space<vmem>>, vector<3x4x128xf32>,
    } else {
    }
    %c0 = arith.constant 0 : index
    %c0_1 = arith.constant 0 : index
    %c0_2 = arith.constant 0 : index
    %c0_3 = arith.constant 0 : index
    %3 = vector.load %arg3[%c0, %c0_1, %c0_2, %c0_3] : memref<1x4x4x128xf32, #tpu.memory_space<vmem>>, vector<1x4x4x128xf32>
    %4 = vector.shape_cast %3 : vector<1x4x4x128xf32> to vector<4x4x128xf32>
    %c0_4 = arith.constant 0 : index
    %c0_5 = arith.constant 0 : index
    %c0_6 = arith.constant 0 : index
    %c0_7 = arith.constant 0 : index
    %5 = vector.load %arg4[%c0_4, %c0_5, %c0_6, %c0_7] : memref<1x4x4x128xf32, #tpu.memory_space<vmem>>, vector<1x4x4x128xf32>
    %6 = vector.shape_cast %5 : vector<1x4x4x128xf32> to vector<4x4x128xf32>
    %c1_i32 = arith.constant 1 : i32
    %7 = arith.muli %arg1, %c1_i32 : i32
    %8 = arith.addi %7, %arg2 : i32
    %c4_i32 = arith.constant 4 : i32
    %9 = arith.muli %8, %c4_i32 : i32
    %10 = tpu.iota {dimensions = array<i32: 1>} : vector<4x4x128xi32>
    %11 = vector.broadcast %9 : i32 to vector<4x4x128xi32>
    %12 = arith.addi %10, %11 : vector<4x4x128xi32>
    %c4_i32_8 = arith.constant 4 : i32
    %13 = vector.broadcast %c4_i32_8 : i32 to vector<4x4x128xi32>
    %14 = arith.cmpi slt, %12, %13 : vector<4x4x128xi32>
    %cst = arith.constant 0.000000e+00 : f32
    %15 = vector.broadcast %cst : f32 to vector<4x4x128xf32>
    %16 = arith.cmpf oge, %4, %15 : vector<4x4x128xf32>
    %cst_9 = arith.constant 0.000000e+00 : f32
    %17 = vector.broadcast %cst_9 : f32 to vector<4x4x128xf32>
    %18 = arith.select %14, %6, %17 : vector<4x4x128xi1>, vector<4x4x128xf32>
    %cst_10 = arith.constant 0.000000e+00 : f32
    %19 = vector.broadcast %cst_10 : f32 to vector<4x4x128xf32>
    %20 = arith.select %16, %18, %19 : vector<4x4x128xi1>, vector<4x4x128xf32>
    %21 = arith.andi %16, %14 : vector<4x4x128xi1>
    %cst_11 = arith.constant 1.000000e+00 : f32
    %cst_12 = arith.constant 0.000000e+00 : f32
    %22 = vector.broadcast %cst_11 : f32 to vector<4x4x128xf32>
    %23 = vector.broadcast %cst_12 : f32 to vector<4x4x128xf32>
    %24 = arith.select %21, %22, %23 : vector<4x4x128xi1>, vector<4x4x128xf32>
    %c0_13 = arith.constant 0 : index
    %c0_14 = arith.constant 0 : index
    %c0_15 = arith.constant 0 : index
    %25 = vector.load %arg6[%c0_13, %c0_14, %c0_15] : memref<3x4x128xf32, #tpu.memory_space<vmem>>, vector<1x4x128xf32>
    %26 = vector.shape_cast %25 : vector<1x4x128xf32> to vector<4x128xf32>
    %cst_16 = arith.constant dense<0.000000e+00> : vector<4x128xf32>
    %27 = vector.multi_reduction <add>, %20, %cst_16 [1] : vector<4x4x128xf32> to vector<4x128xf32>
    %28 = arith.addf %26, %27 : vector<4x128xf32>
    %c0_17 = arith.constant 0 : index
    %c0_18 = arith.constant 0 : index
    %c0_19 = arith.constant 0 : index
    %29 = vector.load %arg6[%c0_17, %c0_18, %c0_19] : memref<3x4x128xf32, #tpu.memory_space<vmem>>, vector<1x4x128xf32>
    %30 = vector.shape_cast %29 : vector<1x4x128xf32> to vector<4x128xf32>
    %31 = vector.shape_cast %28 : vector<4x128xf32> to vector<1x4x128xf32>
    tpu.vector_store %arg6[%c0_17, %c0_18, %c0_19], %31 {strides = array<i32>} : memref<3x4x128xf32, #tpu.memory_space<vmem>>, vector<1x4x128xf32>,
    %c1 = arith.constant 1 : index
    %c0_20 = arith.constant 0 : index
    %c0_21 = arith.constant 0 : index
    %32 = vector.load %arg6[%c1, %c0_20, %c0_21] : memref<3x4x128xf32, #tpu.memory_space<vmem>>, vector<1x4x128xf32>
    %33 = vector.shape_cast %32 : vector<1x4x128xf32> to vector<4x128xf32>
    %cst_22 = arith.constant dense<0.000000e+00> : vector<4x128xf32>
    %34 = vector.multi_reduction <add>, %24, %cst_22 [1] : vector<4x4x128xf32> to vector<4x128xf32>
    %35 = arith.addf %33, %34 : vector<4x128xf32>
    %c1_23 = arith.constant 1 : index
    %c0_24 = arith.constant 0 : index
    %c0_25 = arith.constant 0 : index
    %36 = vector.load %arg6[%c1_23, %c0_24, %c0_25] : memref<3x4x128xf32, #tpu.memory_space<vmem>>, vector<1x4x128xf32>
    %37 = vector.shape_cast %36 : vector<1x4x128xf32> to vector<4x128xf32>
    %38 = vector.shape_cast %35 : vector<4x128xf32> to vector<1x4x128xf32>
    tpu.vector_store %arg6[%c1_23, %c0_24, %c0_25], %38 {strides = array<i32>} : memref<3x4x128xf32, #tpu.memory_space<vmem>>, vector<1x4x128xf32>,
    %c2 = arith.constant 2 : index
    %c0_26 = arith.constant 0 : index
    %c0_27 = arith.constant 0 : index
    %39 = vector.load %arg6[%c2, %c0_26, %c0_27] : memref<3x4x128xf32, #tpu.memory_space<vmem>>, vector<1x4x128xf32>
    %40 = vector.shape_cast %39 : vector<1x4x128xf32> to vector<4x128xf32>
    %cst_28 = arith.constant dense<0.000000e+00> : vector<4x128xf32>
    %41 = vector.multi_reduction <add>, %18, %cst_28 [1] : vector<4x4x128xf32> to vector<4x128xf32>
    %42 = arith.addf %40, %41 : vector<4x128xf32>
    %c2_29 = arith.constant 2 : index
    %c0_30 = arith.constant 0 : index
    %c0_31 = arith.constant 0 : index
    %43 = vector.load %arg6[%c2_29, %c0_30, %c0_31] : memref<3x4x128xf32, #tpu.memory_space<vmem>>, vector<1x4x128xf32>
    %44 = vector.shape_cast %43 : vector<1x4x128xf32> to vector<4x128xf32>
    %45 = vector.shape_cast %42 : vector<4x128xf32> to vector<1x4x128xf32>
    tpu.vector_store %arg6[%c2_29, %c0_30, %c0_31], %45 {strides = array<i32>} : memref<3x4x128xf32, #tpu.memory_space<vmem>>, vector<1x4x128xf32>,
    %c0_i32_32 = arith.constant 0 : i32
    %46 = arith.cmpi eq, %arg2, %c0_i32_32 : i32
    %47 = arith.extui %46 : i1 to i32
    %c0_i32_33 = arith.constant 0 : i32
    %48 = arith.cmpi ne, %47, %c0_i32_33 : i32
    scf.if %48 {
      %c0_34 = arith.constant 0 : index
      %c0_35 = arith.constant 0 : index
      %c0_36 = arith.constant 0 : index
      %49 = vector.load %arg6[%c0_34, %c0_35, %c0_36] : memref<3x4x128xf32, #tpu.memory_space<vmem>>, vector<3x4x128xf32>
      %cst_37 = arith.constant dense<0.000000e+00> : vector<3x4xf32>
      %50 = vector.multi_reduction <add>, %49, %cst_37 [2] : vector<3x4x128xf32> to vector<3x4xf32>
      %51 = vector.shape_cast %50 : vector<3x4xf32> to vector<1x1x3x4xf32>
      %c0_38 = arith.constant 0 : index
      %c0_39 = arith.constant 0 : index
      %c0_40 = arith.constant 0 : index
      %c0_41 = arith.constant 0 : index
      %52 = vector.load %arg5[%c0_38, %c0_39, %c0_40, %c0_41] : memref<1x1x3x4xf32, #tpu.memory_space<vmem>>, vector<1x1x3x4xf32>
      tpu.vector_store %arg5[%c0_38, %c0_39, %c0_40, %c0_41], %51 {strides = array<i32>} : memref<1x1x3x4xf32, #tpu.memory_space<vmem>>, vector<1x1x3x4xf32>,
    } else {
    }
    return
  }
  func.func @transform_0(%arg0: i32, %arg1: i32, %arg2: i32) -> (i32, i32, i32, i32) {
    %c1_i32 = arith.constant 1 : i32
    %0 = arith.muli %arg1, %c1_i32 : i32
    %1 = arith.addi %0, %arg2 : i32
    %c0_i32 = arith.constant 0 : i32
    %2 = arith.minsi %1, %c0_i32 : i32
    %c0_i32_0 = arith.constant 0 : i32
    %c0_i32_1 = arith.constant 0 : i32
    %c0_i32_2 = arith.constant 0 : i32
    return %arg0, %c0_i32_0, %2, %c0_i32_1 : i32, i32, i32, i32
  }
  func.func @transform_1(%arg0: i32, %arg1: i32, %arg2: i32) -> (i32, i32, i32, i32) {
    %c1_i32 = arith.constant 1 : i32
    %0 = arith.muli %arg1, %c1_i32 : i32
    %1 = arith.addi %0, %arg2 : i32
    %c0_i32 = arith.constant 0 : i32
    %2 = arith.minsi %1, %c0_i32 : i32
    %c0_i32_0 = arith.constant 0 : i32
    %c0_i32_1 = arith.constant 0 : i32
    %c0_i32_2 = arith.constant 0 : i32
    return %arg0, %c0_i32_0, %2, %c0_i32_1 : i32, i32, i32, i32
  }
  func.func @transform_2(%arg0: i32, %arg1: i32, %arg2: i32) -> (i32, i32, i32, i32) {
    %c0_i32 = arith.constant 0 : i32
    %c0_i32_0 = arith.constant 0 : i32
    %c0_i32_1 = arith.constant 0 : i32
    return %arg0, %arg1, %c0_i32, %c0_i32_0 : i32, i32, i32, i32
  }
}

</mosaic_0001>

<llo_original>
// kernel: tpu_custom_call.1
$region0: #{tpu_custom_call.1}
  #allocation0 [shape = 'u32[]', space=smem, size = 0x4, offset = 0x4, fixed_abs, tag = 'smem constant byte address 0x4 - core index']
  #allocation1 [shape = 'u32[144,128]{1,0:T(1,128)}', space=vmem, size = 0x12000, scoped, tag = 'internal scratch']
  #allocation2 [shape = 'f32[3,4,128]{2,1,0:T(4,128)}', space=vmem, size = 0x1800, scoped, tag = 'scratch operand']
  %s0 = inlined_call_operand.hbm [shape: f32[3,4,4,128], index: 0, kind: input, shape index: {}]
  %s1 = inlined_call_operand.hbm [shape: f32[3,4,4,128], index: 1, kind: input, shape index: {}]
  %s2 = inlined_call_operand.vmem [shape: f32[3,1,3,4], index: 2, kind: output, shape index: {}]
  %s3 = sld [smem:[#allocation0]]
  $region57: #{tpu_custom_call.1} parent=0
    _
  %s5 = ssub.s32 1, %s3
  %s6 = scalar_select 0, %s5, %s3
  $region1: #{tpu_custom_call.1} parent=0
    #allocation3 [shape = 'u8[16384]{0}', space=vmem, size = 0x4000, scoped, tag = 'input window, operand 0']
    #allocation4 [shape = 's32[2]{0}', space=sflag, size = 0x8, scoped, tag = 'scoped memory for tpu_custom_call.1']
    #allocation5 [shape = 'u8[16384]{0}', space=vmem, size = 0x4000, scoped, tag = 'input window, operand 1']
    #allocation6 [shape = 's32[2]{0}', space=sflag, size = 0x8, scoped, tag = 'scoped memory for tpu_custom_call.1']
    %7 = vsyncpa [#allocation4], 0
    %s8 = scalar_lea.sflag [#allocation4], 1
    %9 = vsyncpa %s8, 0
    %10 = vsyncpa [#allocation6], 0
    %s11 = scalar_lea.sflag [#allocation6], 1
    %12 = vsyncpa %s11, 0
    loop: start=0, step=1, limit=5
    $region2: #{tpu_custom_call.1} parent=1 // loop_pre_header
      _
    $region3: #{tpu_custom_call.1} parent=1 // loop_header
      %s14 = sphi 0, %s18
      %p15 = scmp.ge.s32.totalorder %s14, 5
      %s21 = sphi 0, %s40
      %s22 = sphi 0, %s36
      %s23 = sphi 0, %s32
      %s24 = sphi 0, %s21
      %s25 = sphi 0, %s22
      %s26 = sphi 0, %s23
      %s27 = sphi 0, %s24
      %s28 = sphi 0, %s25
      %s29 = sphi 0, %s26
      %s51 = sphi 0, %s53
      %s54 = sphi 0, %s51
      %s55 = sphi 0, %s54
      %s71 = sphi 0, %s55
      %s85 = sphi 0, %s87
      %s88 = sphi 0, %s85
      %s89 = sphi 0, %s88
      %s105 = sphi 0, %s89
      %s113 = sphi 0, %s115
      %s116 = sphi 0, %s113
      %s117 = sphi 0, %s116
      %s133 = sphi 0, %s117
    $region4: #{tpu_custom_call.1} parent=1 // loop_header_branch
      %17 = sbr.rel (%p15) target = $region8
    $region5: #{tpu_custom_call.1} parent=1 // loop_body
      %s19 = ssub.s32 %s14, 1
      %s20 = ssub.s32 %s14, 2
      %s30 = sadd.s32 1, %s23
      %p31 = scmp.ge.s32.totalorder %s30, 1
      %s32 = scalar_select %p31, 0, %s30
      %s33 = sadd.s32 1, %s22
      %s34 = scalar_select %p31, %s33, %s22
      %p35 = scmp.ge.s32.totalorder %s34, 1
      %s36 = scalar_select %p35, 0, %s34
      %s37 = sadd.s32 1, %s21
      %s38 = scalar_select %p35, %s37, %s21
      %p39 = scmp.ge.s32.totalorder %s38, 3
      %s40 = scalar_select %p39, 0, %s38
      %s41 = sadd.s32 %s22, %s23
      %p42 = scmp.lt.s32.totalorder %s41, 0
      %s43 = scalar_select %p42, %s41, 0
      %s44 = sadd.s32 %s36, %s32
      %p45 = scmp.lt.s32.totalorder %s44, 0
      %s46 = scalar_select %p45, %s44, 0
      %s47 = ssub.s32 %s21, %s40
      %s48 = ssub.s32 %s43, %s46
      %s49 = sor.u32 %s47, %s48
      %p50 = scmp.eq.s32.totalorder %s49, 0
      %s52 = sadd.s32 %s51, 1
      %s53 = scalar_select %p50, %s51, %s52
      %p56 = pneg %p50
      %p57 = scmp.eq.s32.totalorder %s14, 2
      %p58 = por %p56, %p57
      %p59 = scmp.ne.s32.totalorder %s51, %s54
      %p60 = scmp.eq.s32.totalorder %s14, 0
      %p61 = por %p59, %p60
      %p62 = scmp.ne.s32.totalorder %s51, %s54
      %p63 = scmp.eq.s32.totalorder %s19, 2
      %p64 = por %p62, %p63
      %p65 = scmp.ne.s32.totalorder %s54, %s55
      %p66 = scmp.eq.s32.totalorder %s19, 0
      %p67 = por %p65, %p66
      %p68 = scmp.ne.s32.totalorder %s54, %s55
      %p69 = scmp.eq.s32.totalorder %s20, 2
      %p70 = por %p68, %p69
      %p72 = scmp.ne.s32.totalorder %s55, %s71
      %p73 = scmp.eq.s32.totalorder %s20, 0
      %p74 = por %p72, %p73
      %s75 = sadd.s32 %s22, %s23
      %p76 = scmp.lt.s32.totalorder %s75, 0
      %s77 = scalar_select %p76, %s75, 0
      %s78 = sadd.s32 %s36, %s32
      %p79 = scmp.lt.s32.totalorder %s78, 0
      %s80 = scalar_select %p79, %s78, 0
      %s81 = ssub.s32 %s21, %s40
      %s82 = ssub.s32 %s77, %s80
      %s83 = sor.u32 %s81, %s82
      %p84 = scmp.eq.s32.totalorder %s83, 0
      %s86 = sadd.s32 %s85, 1
      %s87 = scalar_select %p84, %s85, %s86
      %p90 = pneg %p84
      %p91 = scmp.eq.s32.totalorder %s14, 2
      %p92 = por %p90, %p91
      %p93 = scmp.ne.s32.totalorder %s85, %s88
      %p94 = scmp.eq.s32.totalorder %s14, 0
      %p95 = por %p93, %p94
      %p96 = scmp.ne.s32.totalorder %s85, %s88
      %p97 = scmp.eq.s32.totalorder %s19, 2
      %p98 = por %p96, %p97
      %p99 = scmp.ne.s32.totalorder %s88, %s89
      %p100 = scmp.eq.s32.totalorder %s19, 0
      %p101 = por %p99, %p100
      %p102 = scmp.ne.s32.totalorder %s88, %s89
      %p103 = scmp.eq.s32.totalorder %s20, 2
      %p104 = por %p102, %p103
      %p106 = scmp.ne.s32.totalorder %s89, %s105
      %p107 = scmp.eq.s32.totalorder %s20, 0
      %p108 = por %p106, %p107
      %s109 = ssub.s32 %s21, %s40
      %s110 = ssub.s32 %s22, %s36
      %s111 = sor.u32 %s109, %s110
      %p112 = scmp.eq.s32.totalorder %s111, 0
      %s114 = sadd.s32 %s113, 1
      %s115 = scalar_select %p112, %s113, %s114
      %p118 = pneg %p112
      %p119 = scmp.eq.s32.totalorder %s14, 2
      %p120 = por %p118, %p119
      %p121 = scmp.ne.s32.totalorder %s113, %s116
      %p122 = scmp.eq.s32.totalorder %s14, 0
      %p123 = por %p121, %p122
      %p124 = scmp.ne.s32.totalorder %s113, %s116
      %p125 = scmp.eq.s32.totalorder %s19, 2
      %p126 = por %p124, %p125
      %p127 = scmp.ne.s32.totalorder %s116, %s117
      %p128 = scmp.eq.s32.totalorder %s19, 0
      %p129 = por %p127, %p128
      %p130 = scmp.ne.s32.totalorder %s116, %s117
      %p131 = scmp.eq.s32.totalorder %s20, 2
      %p132 = por %p130, %p131
      %p134 = scmp.ne.s32.totalorder %s117, %s133
      %p135 = scmp.eq.s32.totalorder %s20, 0
      %p136 = por %p134, %p135
      %p137 = scmp.le.s32.totalorder 1, %s14
      %p138 = scmp.lt.s32.totalorder %s14, 4
      %p139 = pnand %p137, %p138
      %p140 = pneg %p139
      // Predicated region
      $region9: #{tpu_custom_call.1} parent=5 // pred_check
        _
      $region10: #{tpu_custom_call.1} parent=5 // pred_check_branch
        %142 = sbr.rel (%p139) target = $region12
      $region11: #{tpu_custom_call.1} parent=5 // pred_region
        %s143 = ssub.s32 %s14, 1
      $region12: #{tpu_custom_call.1} parent=5 // pred_fallthru
        _
      %p144 = scmp.lt.s32.totalorder %s14, 3
      // Predicated region
      $region13: #{tpu_custom_call.1} parent=5 // pred_check
        %p145 = pneg %p144
      $region14: #{tpu_custom_call.1} parent=5 // pred_check_branch
        %147 = sbr.rel (%p145) target = $region16
      $region15: #{tpu_custom_call.1} parent=5 // pred_region
        // Predicated region
        $region17: #{tpu_custom_call.1} parent=15 // pred_check
          %p148 = pneg %p61
        $region18: #{tpu_custom_call.1} parent=15 // pred_check_branch
          %150 = sbr.rel (%p148) target = $region20
        $region19: #{tpu_custom_call.1} parent=15 // pred_region
          %s151 = sand.u32 %s51, 1
          %s152 = scalar_lea.sflag [#allocation4], %s151
          %s153 = sand.u32 %s51, 1
          %s154 = smul.addr %s153, 16
          %s155 = scalar_lea.vmem [#allocation3], %s154
          %s156 = sadd.s32 %s22, %s23
          %p157 = scmp.lt.s32.totalorder %s156, 0
          %s158 = scalar_select %p157, %s156, 0
          %s160 = ssub.s32 256, 256
          %161 = vsyncadd %s152, %s160
          %s162 = smul.addr %s21, 4
          %s163 = sadd.s32 %s158, %s162
          %s164 = smul.addr %s163, 64
          %s165 = scalar_lea.hbm %s0, %s164
          %s166 = sshll.u32 %s155, 4
          %s167 = int_to_ptr.vmem [resolvable:$true] %s166
          %172 = dma.hbm_to_vmem [thread:$0]  %s165, 256, %s167, %s152, 64, 64, 4
        $region20: #{tpu_custom_call.1} parent=15 // pred_fallthru
          _
        // Predicated region
        $region21: #{tpu_custom_call.1} parent=15 // pred_check
          %p173 = pneg %p95
        $region22: #{tpu_custom_call.1} parent=15 // pred_check_branch
          %175 = sbr.rel (%p173) target = $region24
        $region23: #{tpu_custom_call.1} parent=15 // pred_region
          %s176 = sand.u32 %s85, 1
          %s177 = scalar_lea.sflag [#allocation6], %s176
          %s178 = sand.u32 %s85, 1
          %s179 = smul.addr %s178, 16
          %s180 = scalar_lea.vmem [#allocation5], %s179
          %s181 = sadd.s32 %s22, %s23
          %p182 = scmp.lt.s32.totalorder %s181, 0
          %s183 = scalar_select %p182, %s181, 0
          %s185 = ssub.s32 256, 256
          %186 = vsyncadd %s177, %s185
          %s187 = smul.addr %s21, 4
          %s188 = sadd.s32 %s183, %s187
          %s189 = smul.addr %s188, 64
          %s190 = scalar_lea.hbm %s1, %s189
          %s191 = sshll.u32 %s180, 4
          %s192 = int_to_ptr.vmem [resolvable:$true] %s191
          %197 = dma.hbm_to_vmem [thread:$0]  %s190, 256, %s192, %s177, 64, 64, 4
        $region24: #{tpu_custom_call.1} parent=15 // pred_fallthru
          _
      $region16: #{tpu_custom_call.1} parent=5 // pred_fallthru
        _
      %p198 = scmp.le.s32.totalorder 1, %s14
      %p199 = scmp.lt.s32.totalorder %s14, 4
      %p200 = pnand %p198, %p199
      %p201 = pneg %p200
      // Predicated region
      $region25: #{tpu_custom_call.1} parent=5 // pred_check
        _
      $region26: #{tpu_custom_call.1} parent=5 // pred_check_branch
        %203 = sbr.rel (%p200) target = $region28
      $region27: #{tpu_custom_call.1} parent=5 // pred_region
        %s204 = ssub.s32 %s14, 1
        %s205 = sand.u32 %s54, 1
        %s206 = scalar_lea.sflag [#allocation4], %s205
        %s207 = sand.u32 %s54, 1
        %s208 = smul.addr %s207, 16
        %s209 = scalar_lea.vmem [#allocation3], %s208
        // Predicated region
        $region29: #{tpu_custom_call.1} parent=27 // pred_check
          %p210 = pneg %p67
        $region30: #{tpu_custom_call.1} parent=27 // pred_check_branch
          %212 = sbr.rel (%p210) target = $region32
        $region31: #{tpu_custom_call.1} parent=27 // pred_region
          %213 = dma.done %s206, 256
        $region32: #{tpu_custom_call.1} parent=27 // pred_fallthru
          _
        %s214 = sand.u32 %s88, 1
        %s215 = scalar_lea.sflag [#allocation6], %s214
        %s216 = sand.u32 %s88, 1
        %s217 = smul.addr %s216, 16
        %s218 = scalar_lea.vmem [#allocation5], %s217
        // Predicated region
        $region33: #{tpu_custom_call.1} parent=27 // pred_check
          %p219 = pneg %p101
        $region34: #{tpu_custom_call.1} parent=27 // pred_check_branch
          %221 = sbr.rel (%p219) target = $region36
        $region35: #{tpu_custom_call.1} parent=27 // pred_region
          %222 = dma.done %s215, 256
        $region36: #{tpu_custom_call.1} parent=27 // pred_fallthru
          _
        %s223 = sand.u32 %s54, 1
        %s224 = scalar_lea.sflag [#allocation4], %s223
        %s225 = sand.u32 %s54, 1
        %s226 = smul.addr %s225, 16
        %s227 = scalar_lea.vmem [#allocation3], %s226
        %p228 = pneg %p67
        %p229 = pneg %p64
        %s230 = sand.u32 %s88, 1
        %s231 = scalar_lea.sflag [#allocation6], %s230
        %s232 = sand.u32 %s88, 1
        %s233 = smul.addr %s232, 16
        %s234 = scalar_lea.vmem [#allocation5], %s233
        %p235 = pneg %p101
        %p236 = pneg %p98
        %p237 = pneg %p129
        %p238 = pneg %p126
        %p239 = scmp.lt.s32.totalorder %s24, 2
        %s240 = scalar_select %p239, %s24, 2
        %p241 = scmp.lt.s32.totalorder %s25, 0
        %s242 = scalar_select %p241, %s25, 0
        %s243 = sadd.s32 %s242, %s240
        %s244 = smul.addr %s243, 4
        %s245 = scalar_lea.vmem %s2, %s244
        %s246 = sadd.s32 %s25, %s26
        %p247 = scmp.lt.s32.totalorder %s246, 0
        %s248 = scalar_select %p247, %s246, 0
        %s249 = sadd.s32 %s25, %s26
        %p250 = scmp.lt.s32.totalorder %s249, 0
        %s251 = scalar_select %p250, %s249, 0
        %p252 = scmp.lt.s32.totalorder %s24, 2
        %s253 = scalar_select %p252, %s24, 2
        %p254 = scmp.lt.s32.totalorder %s25, 0
        %s255 = scalar_select %p254, %s25, 0
        %s256 = sadd.s32 %s255, %s253
        %s257 = smul.addr %s256, 4
        %s258 = scalar_lea.vmem %s2, %s257
        %p259 = scmp.eq.s32.totalorder %s26, 0
        // Predicated region
        $region37: #{tpu_custom_call.1} parent=27 // pred_check
          %p260 = pneg %p259
        $region38: #{tpu_custom_call.1} parent=27 // pred_check_branch
          %262 = sbr.rel (%p260) target = $region40
        $region39: #{tpu_custom_call.1} parent=27 // pred_region
          %263 = vst [vmem:[#allocation2] sm:$0xf] 0.0
          %264 = vst [vmem:[#allocation2 + $0x4] sm:$0xf] 0.0
          %265 = vst [vmem:[#allocation2 + $0x8] sm:$0xf] 0.0
        $region40: #{tpu_custom_call.1} parent=27 // pred_fallthru
          _
        %v266 = vld [vmem:[%s209] sm:$0xf]
        %v267 = vld [vmem:[%s209 + $0x4] sm:$0xf]
        %v268 = vld [vmem:[%s209 + $0x8] sm:$0xf]
        %v269 = vld [vmem:[%s209 + $0xc] sm:$0xf]
        %v270 = vld [vmem:[%s218] sm:$0xf]
        %v271 = vld [vmem:[%s218 + $0x4] sm:$0xf]
        %v272 = vld [vmem:[%s218 + $0x8] sm:$0xf]
        %v273 = vld [vmem:[%s218 + $0xc] sm:$0xf]
        %s274 = sadd.s32 %s25, %s26
        %s275 = smul.u32 %s274, 4
        %v276 = vlaneseq
        %v277 = vshrl.u32 %v276, 7
        %v278 = vstv %s275
        %v279 = vadd.s32 %v277, %v278
        %vm280 = vcmp.lt.s32.totalorder %v279, 4
        %vm281 = vcmp.ge.f32.partialorder %v266, 0.0
        %vm282 = vcmp.ge.f32.partialorder %v267, 0.0
        %vm283 = vcmp.ge.f32.partialorder %v268, 0.0
        %vm284 = vcmp.ge.f32.partialorder %v269, 0.0
        %v285 = vsel %vm280, %v270, 0.0
        %v286 = vsel %vm280, %v271, 0.0
        %v287 = vsel %vm280, %v272, 0.0
        %v288 = vsel %vm280, %v273, 0.0
        %v289 = vsel %vm281, %v285, 0.0
        %v290 = vsel %vm282, %v286, 0.0
        %v291 = vsel %vm283, %v287, 0.0
        %v292 = vsel %vm284, %v288, 0.0
        %vm293 = vmand %vm281, %vm280
        %vm294 = vmand %vm282, %vm280
        %vm295 = vmand %vm283, %vm280
        %vm296 = vmand %vm284, %vm280
        %v297 = vsel %vm293, 1.0, 0.0
        %v298 = vsel %vm294, 1.0, 0.0
        %v299 = vsel %vm295, 1.0, 0.0
        %v300 = vsel %vm296, 1.0, 0.0
        %v301 = vld [vmem:[#allocation2] sm:$0xf]
        %vm302 = vcmask 1043456
        %v303 = vsel %vm302, %v289, 0.0
        %v304 = vrot.slane %v303, 4
        %v305 = vadd.f32 %v303, %v304
        %v306 = vrot.slane %v305, 2
        %v307 = vadd.f32 %v305, %v306
        %v308 = vrot.slane %v307, 1
        %v309 = vadd.f32 %v307, %v308
        %v310 = vsel %vm302, %v290, 0.0
        %v311 = vrot.slane %v310, 4
        %v312 = vadd.f32 %v310, %v311
        %v313 = vrot.slane %v312, 2
        %v314 = vadd.f32 %v312, %v313
        %v315 = vrot.slane %v314, 1
        %v316 = vadd.f32 %v314, %v315
        %v317 = vsel %vm302, %v291, 0.0
        %v318 = vrot.slane %v317, 4
        %v319 = vadd.f32 %v317, %v318
        %v320 = vrot.slane %v319, 2
        %v321 = vadd.f32 %v319, %v320
        %v322 = vrot.slane %v321, 1
        %v323 = vadd.f32 %v321, %v322
        %v324 = vsel %vm302, %v292, 0.0
        %v325 = vrot.slane %v324, 4
        %v326 = vadd.f32 %v324, %v325
        %v327 = vrot.slane %v326, 2
        %v328 = vadd.f32 %v326, %v327
        %v329 = vrot.slane %v328, 1
        %v330 = vadd.f32 %v328, %v329
        %vm335 = vcmask 1041409
        %v336 = vsel %vm335, %v316, %v309
        %vm337 = vcmask 1042434
        %v338 = vsel %vm337, %v323, %v336
        %vm339 = vcmask 1043459
        %v340 = vsel %vm339, %v330, %v338
        %v342 = vadd.f32 %v301, %v340
        %343 = vst [vmem:[#allocation2] sm:$0xf] %v342
        %s344 = scalar_lea.vmem [#allocation2], 4
        %v345 = vld [vmem:[%s344] sm:$0xf]
        %v346 = vsel %vm302, %v297, 0.0
        %v347 = vrot.slane %v346, 4
        %v348 = vadd.f32 %v346, %v347
        %v349 = vrot.slane %v348, 2
        %v350 = vadd.f32 %v348, %v349
        %v351 = vrot.slane %v350, 1
        %v352 = vadd.f32 %v350, %v351
        %v353 = vsel %vm302, %v298, 0.0
        %v354 = vrot.slane %v353, 4
        %v355 = vadd.f32 %v353, %v354
        %v356 = vrot.slane %v355, 2
        %v357 = vadd.f32 %v355, %v356
        %v358 = vrot.slane %v357, 1
        %v359 = vadd.f32 %v357, %v358
        %v360 = vsel %vm302, %v299, 0.0
        %v361 = vrot.slane %v360, 4
        %v362 = vadd.f32 %v360, %v361
        %v363 = vrot.slane %v362, 2
        %v364 = vadd.f32 %v362, %v363
        %v365 = vrot.slane %v364, 1
        %v366 = vadd.f32 %v364, %v365
        %v367 = vsel %vm302, %v300, 0.0
        %v368 = vrot.slane %v367, 4
        %v369 = vadd.f32 %v367, %v368
        %v370 = vrot.slane %v369, 2
        %v371 = vadd.f32 %v369, %v370
        %v372 = vrot.slane %v371, 1
        %v373 = vadd.f32 %v371, %v372
        %v378 = vsel %vm335, %v359, %v352
        %v379 = vsel %vm337, %v366, %v378
        %v380 = vsel %vm339, %v373, %v379
        %v382 = vadd.f32 %v345, %v380
        %383 = vst [vmem:[%s344] sm:$0xf] %v382
        %s384 = scalar_lea.vmem [#allocation2], 8
        %v385 = vld [vmem:[%s384] sm:$0xf]
        %v386 = vsel %vm302, %v285, 0.0
        %v387 = vrot.slane %v386, 4
        %v388 = vadd.f32 %v386, %v387
        %v389 = vrot.slane %v388, 2
        %v390 = vadd.f32 %v388, %v389
        %v391 = vrot.slane %v390, 1
        %v392 = vadd.f32 %v390, %v391
        %v393 = vsel %vm302, %v286, 0.0
        %v394 = vrot.slane %v393, 4
        %v395 = vadd.f32 %v393, %v394
        %v396 = vrot.slane %v395, 2
        %v397 = vadd.f32 %v395, %v396
        %v398 = vrot.slane %v397, 1
        %v399 = vadd.f32 %v397, %v398
        %v400 = vsel %vm302, %v287, 0.0
        %v401 = vrot.slane %v400, 4
        %v402 = vadd.f32 %v400, %v401
        %v403 = vrot.slane %v402, 2
        %v404 = vadd.f32 %v402, %v403
        %v405 = vrot.slane %v404, 1
        %v406 = vadd.f32 %v404, %v405
        %v407 = vsel %vm302, %v288, 0.0
        %v408 = vrot.slane %v407, 4
        %v409 = vadd.f32 %v407, %v408
        %v410 = vrot.slane %v409, 2
        %v411 = vadd.f32 %v409, %v410
        %v412 = vrot.slane %v411, 1
        %v413 = vadd.f32 %v411, %v412
        %v418 = vsel %vm335, %v399, %v392
        %v419 = vsel %vm337, %v406, %v418
        %v420 = vsel %vm339, %v413, %v419
        %v422 = vadd.f32 %v385, %v420
        %423 = vst [vmem:[%s384] sm:$0xf] %v422
        // Predicated region
        $region41: #{tpu_custom_call.1} parent=27 // pred_check
          %p424 = pneg %p259
        $region42: #{tpu_custom_call.1} parent=27 // pred_check_branch
          %426 = sbr.rel (%p424) target = $region44
        $region43: #{tpu_custom_call.1} parent=27 // pred_region
          %v427 = vld [vmem:[#allocation2] sm:$0xf]
          %v428 = vld [vmem:[#allocation2 + $0x4] sm:$0xf]
          %v429 = vld [vmem:[#allocation2 + $0x8] sm:$0xf]
          %v430 = vsel %vm302, %v427, 0.0
          %431 = vadd.xlane.f32.xlu0 %v430
          %v432 = vpop.xlane.xlu0 %431
          %v433 = vsel %vm302, %v428, 0.0
          %434 = vadd.xlane.f32.xlu0 %v433
          %v435 = vpop.xlane.xlu0 %434
          %v436 = vsel %vm302, %v429, 0.0
          %437 = vadd.xlane.f32.xlu0 %v436
          %v438 = vpop.xlane.xlu0 %437
          %v442 = vlaneseq
          %v443 = vand.u32 %v442, 127
          %v444 = vlaneseq
          %v445 = vshrl.u32 %v444, 7
          %v446 = vsub.s32 %v443, %v445
          %v447 = vrot.slane %v432, %v446
          %v448 = vlaneseq
          %v449 = vshrl.u32 %v448, 7
          %v450 = vsub.s32 %v443, %v449
          %v451 = vrot.slane %v435, %v450
          %v452 = vlaneseq
          %v453 = vshrl.u32 %v452, 7
          %v454 = vsub.s32 %v443, %v453
          %v455 = vrot.slane %v438, %v454
          %v456 = vsel %vm335, %v451, %v447
          %v457 = vsel %vm337, %v455, %v456
          %vm459 = vcmask 26624
          %460 = vst.msk [vmem:[%s258] sm:$0x7] %vm459, %v457
        $region44: #{tpu_custom_call.1} parent=27 // pred_fallthru
          _
        %p461 = scmp.lt.s32.totalorder %s24, 2
        %s462 = scalar_select %p461, %s24, 2
        %p463 = scmp.lt.s32.totalorder %s25, 0
        %s464 = scalar_select %p463, %s25, 0
        %s465 = sadd.s32 %s464, %s462
        %s466 = smul.addr %s465, 4
        %s467 = scalar_lea.vmem %s2, %s466
        // Predicated region
        $region45: #{tpu_custom_call.1} parent=27 // pred_check
          %p468 = pneg %p126
        $region46: #{tpu_custom_call.1} parent=27 // pred_check_branch
          %470 = sbr.rel (%p468) target = $region48
        $region47: #{tpu_custom_call.1} parent=27 // pred_region
          _
        $region48: #{tpu_custom_call.1} parent=27 // pred_fallthru
          _
      $region28: #{tpu_custom_call.1} parent=5 // pred_fallthru
        _
      %p471 = scmp.le.s32.totalorder 2, %s14
      // Predicated region
      $region49: #{tpu_custom_call.1} parent=5 // pred_check
        %p472 = pneg %p471
      $region50: #{tpu_custom_call.1} parent=5 // pred_check_branch
        %474 = sbr.rel (%p472) target = $region52
      $region51: #{tpu_custom_call.1} parent=5 // pred_region
        %s475 = ssub.s32 %s14, 2
        // Predicated region
        $region53: #{tpu_custom_call.1} parent=51 // pred_check
          %p476 = pneg %p132
        $region54: #{tpu_custom_call.1} parent=51 // pred_check_branch
          %478 = sbr.rel (%p476) target = $region56
        $region55: #{tpu_custom_call.1} parent=51 // pred_region
          %p479 = scmp.lt.s32.totalorder %s27, 2
          %s480 = scalar_select %p479, %s27, 2
          %p481 = scmp.lt.s32.totalorder %s28, 0
          %s482 = scalar_select %p481, %s28, 0
          %s483 = sadd.s32 %s482, %s480
          %s484 = smul.addr %s483, 4
          %s485 = scalar_lea.vmem %s2, %s484
        $region56: #{tpu_custom_call.1} parent=51 // pred_fallthru
          _
      $region52: #{tpu_custom_call.1} parent=5 // pred_fallthru
        _
    $region6: #{tpu_custom_call.1} parent=1 // loop_footer
      %s18 = sadd.s32 1, %s14
    $region7: #{tpu_custom_call.1} parent=1 // loop_footer_branch
      %13 = sbr.rel target = $region3
    $region8: #{tpu_custom_call.1} parent=1 // loop_exit
      _
    %486 = vsyncpa [#allocation4], 1
    %s487 = scalar_lea.sflag [#allocation4], 1
    %488 = vsyncpa %s487, 1
    %489 = vsyncpa [#allocation6], 1
    %s490 = scalar_lea.sflag [#allocation6], 1
    %491 = vsyncpa %s490, 1

</llo_original>
